<compile_context>
chip_gen: v5e
topology: v5e:2x2
jax: 0.10.0
libtpu: 0.0.40
codegen_flags: <defaults>
</compile_context>

<pallas_src>
import functools

import jax
import jax.numpy as jnp
from jax.experimental import pallas as pl
from jax.experimental.pallas import tpu as pltpu

IGNORE_INDEX = 255


def _ce_dice_kernel(fill_ref, x_ref, t_ref, acc_ref, *,
                    hw_total, tile_hw, tiles_per_chunk, ignore_index,
                    needs_mask):
    """One (C, tile) slab: classes = sublanes, pixels = lanes.

    Accumulates per-lane partials into a packed (3, tile) block:
      row 0: CE numerator   sum over valid px of (lse - x[target])
      row 1: CE denominator count of valid px
      row 2: dice intersection  sum over px of softmax(x)[t_dice]
    """
    j = pl.program_id(2)

    @pl.when(j == 0)
    def _():
        acc_ref[...] = jnp.zeros_like(acc_ref)

    x = x_ref[...]
    if x.dtype != jnp.bfloat16:        # bf16 compute stays bf16 (native on v6e/v7x)
        x = x.astype(jnp.float32)
    t = t_ref[...]                     # (1, T) int32
    C, T = x.shape

    valid = t != ignore_index          # (1, T)
    # DiceLoss remaps ignore_index pixels to target.min() (scalar-prefetched).
    t_d = jnp.where(valid, t, fill_ref[0])

    # ---- softmax statistics over the class (sublane) axis ----
    m = jnp.max(x, axis=0, keepdims=True)                          # (1, T)
    e = jnp.exp(x - m)                                             # (C, T)
    s = jnp.sum(e, axis=0, keepdims=True, dtype=jnp.float32)       # (1, T) f32

    # ---- single class gather: logit at the (remapped) target class ----
    rows = jax.lax.broadcasted_iota(jnp.int32, (C, T), 0)
    picked = jnp.sum(jnp.where(rows == t_d, x, 0.0), axis=0, keepdims=True)

    m32 = m.astype(jnp.float32)
    p32 = picked.astype(jnp.float32)
    lse = m32 + jnp.log(s)                                         # (1, T)

    if needs_mask:
        # ragged tail tile: mask only the (1,T) outputs. OOB garbage never
        # reaches an output through the selected branch of jnp.where.
        pix0 = (pl.program_id(1) * tiles_per_chunk + j) * tile_hw
        col = jax.lax.broadcasted_iota(jnp.int32, (1, T), 1)
        inb = (pix0 + col) < hw_total
        valid = jnp.logical_and(valid, inb)

    # CE uses t_d instead of t: safe, ignore pixels are zeroed by `valid`.
    ce = jnp.where(valid, lse - p32, 0.0)
    # dice: softmax prob at t_d equals exp(picked - lse) -- no second gather.
    prob_d = jnp.exp(p32 - lse)
    if needs_mask:
        prob_d = jnp.where(inb, prob_d, 0.0)

    acc_ref[...] += jnp.concatenate(
        [ce, valid.astype(jnp.float32), prob_d], axis=0)           # (3, T)


def _vmem_budget():
    """(tile byte budget, vmem_limit_bytes) -- generation aware, safe fallback."""
    try:
        vmem = pltpu.get_tpu_info().vmem_capacity_bytes
    except Exception:
        vmem = 0
    if vmem >= 100 * 1024 * 1024:            # v5e / v6e: 128 MiB physical VMEM
        return 24 * 1024 * 1024, 64 * 1024 * 1024
    return 12 * 1024 * 1024, 32 * 1024 * 1024  # v7x (64 MiB) or unknown backend


def _pick_tile(hw, c, itemsize, budget):
    """Largest lane tile (multiple of 128, capped at 32768) whose double-buffered
    VMEM footprint (logits + target + packed accumulator) fits the budget.
    Prefers a tile that divides HW exactly so no tail-mask code is emitted."""
    c_bytes = -(-c * itemsize // 32) * 32             # sublane-padded logits B/lane
    per_lane = 2 * c_bytes + 2 * 8 * 4 + 2 * 8 * 4    # + int32 target + f32 (3,T) acc
    cap = max(128, min(32768, (budget // per_lane) // 128 * 128))
    if hw <= cap:
        return hw, 1, False                            # single block == full pixel dim
    for d in range(cap, 127, -128):                    # largest 128-multiple divisor
        if hw % d == 0 and d >= min(cap, 4096):
            return d, hw // d, False
    return cap, pl.cdiv(hw, cap), (hw % cap) != 0


def ce_dice_loss(logits, target, *, smooth=1.0, ignore_index=IGNORE_INDEX):
    """CE_DiceLoss.forward: CrossEntropy(ignore_index, 'mean') + DiceLoss(smooth)."""
    N, C, H, W = logits.shape
    HW = H * W

    x = logits.reshape(N, C, HW)                       # free view of NCHW, pixels last
    if x.dtype not in (jnp.float32, jnp.bfloat16):
        x = x.astype(jnp.float32)
    # TODO(synk): target could stream as uint8 (classes < 256, ignore=255 fits) for
    # 1 B/px HBM traffic; kept int32 here to stay on the well-trodden layout path.
    t = target.astype(jnp.int32).reshape(N, 1, HW)

    # DiceLoss replaces ignore_index with target.min() when ignore pixels exist.
    # TODO(synk): the exotic PyTorch branch where ignore_index falls inside
    # range(target.min(), target.max()) (only possible when C > 255) is not modeled.
    dice_fill = jnp.min(t).astype(jnp.int32).reshape(1)

    budget, vmem_limit = _vmem_budget()
    T, J, needs_mask = _pick_tile(HW, C, x.dtype.itemsize, budget)

    # v7x megacore: with N == 1 the batch axis cannot feed both TensorCores,
    # so split the pixel-tile axis into two parallel chunks when it is even.
    if N == 1 and J >= 2 and J % 2 == 0:
        P, Jp = 2, J // 2
    else:
        P, Jp = 1, J

    kernel = functools.partial(
        _ce_dice_kernel, hw_total=HW, tile_hw=T, tiles_per_chunk=Jp,
        ignore_index=ignore_index, needs_mask=needs_mask)

    acc = pl.pallas_call(
        kernel,
        out_shape=jax.ShapeDtypeStruct((N, P, 3, T), jnp.float32),
        grid_spec=pltpu.PrefetchScalarGridSpec(
            num_scalar_prefetch=1,
            grid=(N, P, Jp),
            in_specs=[
                pl.BlockSpec((None, C, T), lambda n, p, j, fill: (n, 0, p * Jp + j)),
                pl.BlockSpec((None, 1, T), lambda n, p, j, fill: (n, 0, p * Jp + j)),
            ],
            out_specs=pl.BlockSpec((None, None, 3, T),
                                   lambda n, p, j, fill: (n, p, 0, 0)),
        ),
        compiler_params=pltpu.CompilerParams(
            # batch & pixel-chunk axes parallel (megacore); tile axis is reduction
            dimension_semantics=("parallel", "parallel", "arbitrary"),
            vmem_limit_bytes=vmem_limit,
        ),
    )(dice_fill, x, t)

    # Tiny final reductions + loss formulas (outside the kernel).
    sums = jnp.sum(acc, axis=(0, 1, 3))                # (3,)
    ce_loss = sums[0] / sums[1]                        # mean over non-ignored px
    # softmax rows and one-hot rows each sum to 1 per pixel, so
    # input_flat.sum() + target_flat.sum() == 2 * (#pixels) analytically.
    dice_loss = 1.0 - (2.0 * sums[2] + smooth) / (2.0 * float(N * HW) + smooth)
    return ce_loss + dice_loss


def _reference_loss(logits, target, *, smooth=1.0, ignore_index=IGNORE_INDEX):
    """Pure-JAX mirror of the PyTorch CE_DiceLoss forward (common path)."""
    N, C, H, W = logits.shape
    x = jnp.transpose(logits, (0, 2, 3, 1)).reshape(-1, C).astype(jnp.float32)
    t = target.astype(jnp.int32).reshape(-1)

    lse = jax.scipy.special.logsumexp(x, axis=-1)
    picked = jnp.take_along_axis(x, jnp.clip(t, 0, C - 1)[:, None], axis=-1)[:, 0]
    valid = t != ignore_index
    ce = jnp.sum(jnp.where(valid, lse - picked, 0.0)) / jnp.sum(valid.astype(jnp.float32))

    t_d = jnp.where(t == ignore_index, jnp.min(t), t)
    probs = jax.nn.softmax(x, axis=-1)
    one_hot = jax.nn.one_hot(t_d, C, dtype=jnp.float32)
    inter = jnp.sum(probs * one_hot)
    dice = 1.0 - (2.0 * inter + smooth) / (jnp.sum(probs) + jnp.sum(one_hot) + smooth)
    return ce + dice


if __name__ == "__main__":
    key = jax.random.PRNGKey(0)
    k1, k2, k3 = jax.random.split(key, 3)

    N, C, H, W = 2, 4, 16, 16
    logits = jax.random.normal(k1, (N, C, H, W), dtype=jnp.float32)
    target = jax.random.randint(k2, (N, H, W), 0, C, dtype=jnp.int32)
    # sprinkle in ignored pixels to exercise ignore_index=255 in both losses
    ignore_mask = jax.random.bernoulli(k3, 0.1, (N, H, W))
    target = jnp.where(ignore_mask, IGNORE_INDEX, target)

    loss = ce_dice_loss(logits, target)
    jax.block_until_ready(loss)

    ref = _reference_loss(logits, target)
    assert jnp.allclose(loss, ref, rtol=1e-5, atol=1e-5), (loss, ref)

    print("KERNEL_OK")
</pallas_src>

<mosaic_0001>
module attributes {stable_mosaic.version = 11 : i64} {
  func.func @_ce_dice_kernel(%arg0: i32, %arg1: i32, %arg2: i32, %arg3: memref<1xi32, #tpu.memory_space<smem>>, %arg4: memref<1x4x256xf32, #tpu.memory_space<vmem>>, %arg5: memref<1x1x256xi32, #tpu.memory_space<vmem>>, %arg6: memref<1x1x3x256xf32, #tpu.memory_space<vmem>>) attributes {dimension_semantics = [#tpu.dimension_semantics<parallel>, #tpu.dimension_semantics<parallel>, #tpu.dimension_semantics<arbitrary>], iteration_bounds = array<i64: 2, 1, 1>, scalar_prefetch = 1 : i64, scratch_operands = 0 : i64, tpu.core_type = #tpu.core_type<tc>, window_params = [{transform_indices = @transform_0, window_bounds = array<i64: 1, 4, 256>}, {transform_indices = @transform_1, window_bounds = array<i64: 1, 1, 256>}, {transform_indices = @transform_2, window_bounds = array<i64: 1, 1, 3, 256>}]} {
    %c0_i32 = arith.constant 0 : i32
    %0 = arith.cmpi eq, %arg2, %c0_i32 : i32
    %1 = arith.extui %0 : i1 to i32
    %c0_i32_0 = arith.constant 0 : i32
    %2 = arith.cmpi ne, %1, %c0_i32_0 : i32
    scf.if %2 {
      %cst_19 = arith.constant 0.000000e+00 : f32
      %42 = vector.broadcast %cst_19 : f32 to vector<3x256xf32>
      %c0_20 = arith.constant 0 : index
      %c0_21 = arith.constant 0 : index
      %c0_22 = arith.constant 0 : index
      %c0_23 = arith.constant 0 : index
      %43 = vector.load %arg6[%c0_20, %c0_21, %c0_22, %c0_23] : memref<1x1x3x256xf32, #tpu.memory_space<vmem>>, vector<1x1x3x256xf32>
      %44 = vector.shape_cast %43 : vector<1x1x3x256xf32> to vector<3x256xf32>
      %45 = vector.shape_cast %42 : vector<3x256xf32> to vector<1x1x3x256xf32>
      tpu.vector_store %arg6[%c0_20, %c0_21, %c0_22, %c0_23], %45 {strides = array<i32>} : memref<1x1x3x256xf32, #tpu.memory_space<vmem>>, vector<1x1x3x256xf32>,
    } else {
    }
    %c0 = arith.constant 0 : index
    %c0_1 = arith.constant 0 : index
    %c0_2 = arith.constant 0 : index
    %3 = vector.load %arg4[%c0, %c0_1, %c0_2] : memref<1x4x256xf32, #tpu.memory_space<vmem>>, vector<1x4x256xf32>
    %4 = vector.shape_cast %3 : vector<1x4x256xf32> to vector<4x256xf32>
    %c0_3 = arith.constant 0 : index
    %c0_4 = arith.constant 0 : index
    %c0_5 = arith.constant 0 : index
    %5 = vector.load %arg5[%c0_3, %c0_4, %c0_5] : memref<1x1x256xi32, #tpu.memory_space<vmem>>, vector<1x1x256xi32>
    %6 = vector.shape_cast %5 : vector<1x1x256xi32> to vector<1x256xi32>
    %c255_i32 = arith.constant 255 : i32
    %7 = vector.broadcast %c255_i32 : i32 to vector<1x256xi32>
    %8 = arith.cmpi ne, %6, %7 : vector<1x256xi32>
    %c0_6 = arith.constant 0 : index
    %9 = memref.load %arg3[%c0_6] : memref<1xi32, #tpu.memory_space<smem>>
    %10 = vector.broadcast %9 : i32 to vector<1x256xi32>
    %11 = arith.select %8, %6, %10 : vector<1x256xi1>, vector<1x256xi32>
    %cst = arith.constant dense<0xFF800000> : vector<256xf32>
    %12 = vector.multi_reduction <maximumf>, %4, %cst [0] : vector<4x256xf32> to vector<256xf32>
    %13 = vector.shape_cast %12 : vector<256xf32> to vector<1x256xf32>
    %14 = vector.broadcast %13 : vector<1x256xf32> to vector<4x256xf32>
    %15 = arith.subf %4, %14 : vector<4x256xf32>
    %16 = math.exp %15 : vector<4x256xf32>
    %cst_7 = arith.constant dense<0.000000e+00> : vector<256xf32>
    %17 = vector.multi_reduction <add>, %16, %cst_7 [0] : vector<4x256xf32> to vector<256xf32>
    %18 = vector.shape_cast %17 : vector<256xf32> to vector<1x256xf32>
    %19 = tpu.iota {dimensions = array<i32: 0>} : vector<4x256xi32>
    %20 = vector.broadcast %11 : vector<1x256xi32> to vector<4x256xi32>
    %21 = arith.cmpi eq, %19, %20 : vector<4x256xi32>
    %cst_8 = arith.constant 0.000000e+00 : f32
    %22 = vector.broadcast %cst_8 : f32 to vector<4x256xf32>
    %23 = arith.select %21, %4, %22 : vector<4x256xi1>, vector<4x256xf32>
    %cst_9 = arith.constant dense<0.000000e+00> : vector<256xf32>
    %24 = vector.multi_reduction <add>, %23, %cst_9 [0] : vector<4x256xf32> to vector<256xf32>
    %25 = vector.shape_cast %24 : vector<256xf32> to vector<1x256xf32>
    %26 = math.log %18 : vector<1x256xf32>
    %27 = arith.addf %13, %26 : vector<1x256xf32>
    %28 = arith.subf %27, %25 : vector<1x256xf32>
    %cst_10 = arith.constant 0.000000e+00 : f32
    %29 = vector.broadcast %cst_10 : f32 to vector<1x256xf32>
    %30 = arith.select %8, %28, %29 : vector<1x256xi1>, vector<1x256xf32>
    %31 = arith.subf %25, %27 : vector<1x256xf32>
    %32 = math.exp %31 : vector<1x256xf32>
    %c0_11 = arith.constant 0 : index
    %c0_12 = arith.constant 0 : index
    %c0_13 = arith.constant 0 : index
    %c0_14 = arith.constant 0 : index
    %33 = vector.load %arg6[%c0_11, %c0_12, %c0_13, %c0_14] : memref<1x1x3x256xf32, #tpu.memory_space<vmem>>, vector<1x1x3x256xf32>
    %34 = vector.shape_cast %33 : vector<1x1x3x256xf32> to vector<3x256xf32>
    %35 = arith.extui %8 : vector<1x256xi1> to vector<1x256xi32>
    %36 = arith.sitofp %35 : vector<1x256xi32> to vector<1x256xf32>
    %37 = tpu.concatenate %30, %36, %32 in 0 : vector<1x256xf32>, vector<1x256xf32>, vector<1x256xf32> -> vector<3x256xf32>
    %38 = arith.addf %34, %37 : vector<3x256xf32>
    %c0_15 = arith.constant 0 : index
    %c0_16 = arith.constant 0 : index
    %c0_17 = arith.constant 0 : index
    %c0_18 = arith.constant 0 : index
    %39 = vector.load %arg6[%c0_15, %c0_16, %c0_17, %c0_18] : memref<1x1x3x256xf32, #tpu.memory_space<vmem>>, vector<1x1x3x256xf32>
    %40 = vector.shape_cast %39 : vector<1x1x3x256xf32> to vector<3x256xf32>
    %41 = vector.shape_cast %38 : vector<3x256xf32> to vector<1x1x3x256xf32>
    tpu.vector_store %arg6[%c0_15, %c0_16, %c0_17, %c0_18], %41 {strides = array<i32>} : memref<1x1x3x256xf32, #tpu.memory_space<vmem>>, vector<1x1x3x256xf32>,
    return
  }
  func.func @transform_0(%arg0: i32, %arg1: i32, %arg2: i32, %arg3: memref<1xi32, #tpu.memory_space<smem>>) -> (i32, i32, i32) {
    %c1_i32 = arith.constant 1 : i32
    %0 = arith.muli %arg1, %c1_i32 : i32
    %1 = arith.addi %0, %arg2 : i32
    %c0_i32 = arith.constant 0 : i32
    %c0_i32_0 = arith.constant 0 : i32
    return %arg0, %c0_i32, %1 : i32, i32, i32
  }
  func.func @transform_1(%arg0: i32, %arg1: i32, %arg2: i32, %arg3: memref<1xi32, #tpu.memory_space<smem>>) -> (i32, i32, i32) {
    %c1_i32 = arith.constant 1 : i32
    %0 = arith.muli %arg1, %c1_i32 : i32
    %1 = arith.addi %0, %arg2 : i32
    %c0_i32 = arith.constant 0 : i32
    %c0_i32_0 = arith.constant 0 : i32
    return %arg0, %c0_i32, %1 : i32, i32, i32
  }
  func.func @transform_2(%arg0: i32, %arg1: i32, %arg2: i32, %arg3: memref<1xi32, #tpu.memory_space<smem>>) -> (i32, i32, i32, i32) {
    %c0_i32 = arith.constant 0 : i32
    %c0_i32_0 = arith.constant 0 : i32
    %c0_i32_1 = arith.constant 0 : i32
    return %arg0, %arg1, %c0_i32, %c0_i32_0 : i32, i32, i32, i32
  }
}

</mosaic_0001>

<llo_original>
// kernel: tpu_custom_call.1
$region0: #{tpu_custom_call.1}
  #allocation0 [shape = 'u32[]', space=smem, size = 0x4, offset = 0x4, fixed_abs, tag = 'smem constant byte address 0x4 - core index']
  #allocation1 [shape = 'u32[72,128]{1,0:T(1,128)}', space=vmem, size = 0x9000, scoped, tag = 'internal scratch']
  #allocation2 [shape = 's32[1]{0}', space=sflag, size = 0x4, scoped, tag = 'scoped memory for tpu_custom_call.1']
  #allocation3 [shape = 's32[1]{0:T(128)S(6)}', space=smem, size = 0x200, scoped, tag = 'prefetched SMEM operand 0']
  %s0 = inlined_call_operand.<no memory space> [shape: s32[1], index: 0, kind: input, shape index: {}]
  %s1 = inlined_call_operand.hbm [shape: f32[2,4,256], index: 1, kind: input, shape index: {}]
  %s2 = inlined_call_operand.hbm [shape: s32[2,1,256], index: 2, kind: input, shape index: {}]
  %s3 = inlined_call_operand.vmem [shape: f32[2,1,3,256], index: 3, kind: output, shape index: {}]
  %s4 = sld [smem:[#allocation0]]
  $region53: #{tpu_custom_call.1} parent=0
    _
  %s6 = ssub.s32 1, %s4
  %s7 = scalar_select 0, %s6, %s4
  %8 = sst [smem:[#allocation3]] %s0
  $region1: #{tpu_custom_call.1} parent=0
    #allocation4 [shape = 'u8[8192]{0}', space=vmem, size = 0x2000, scoped, tag = 'input window, operand 1']
    #allocation5 [shape = 's32[2]{0}', space=sflag, size = 0x8, scoped, tag = 'scoped memory for tpu_custom_call.1']
    #allocation6 [shape = 'u8[2048]{0}', space=vmem, size = 0x800, scoped, tag = 'input window, operand 2']
    #allocation7 [shape = 's32[2]{0}', space=sflag, size = 0x8, scoped, tag = 'scoped memory for tpu_custom_call.1']
    %9 = vsyncpa [#allocation5], 0
    %s10 = scalar_lea.sflag [#allocation5], 1
    %11 = vsyncpa %s10, 0
    %12 = vsyncpa [#allocation7], 0
    %s13 = scalar_lea.sflag [#allocation7], 1
    %14 = vsyncpa %s13, 0
    loop: start=0, step=1, limit=4
    $region2: #{tpu_custom_call.1} parent=1 // loop_pre_header
      _
    $region3: #{tpu_custom_call.1} parent=1 // loop_header
      %s16 = sphi 0, %s20
      %p17 = scmp.ge.s32.totalorder %s16, 4
      %s23 = sphi 0, %s42
      %s24 = sphi 0, %s38
      %s25 = sphi 0, %s34
      %s26 = sphi 0, %s23
      %s27 = sphi 0, %s24
      %s28 = sphi 0, %s25
      %s29 = sphi 0, %s26
      %s30 = sphi 0, %s27
      %s31 = sphi 0, %s28
      %s49 = sphi 0, %s51
      %s52 = sphi 0, %s49
      %s53 = sphi 0, %s52
      %s69 = sphi 0, %s53
      %s79 = sphi 0, %s81
      %s82 = sphi 0, %s79
      %s83 = sphi 0, %s82
      %s99 = sphi 0, %s83
      %s107 = sphi 0, %s109
      %s110 = sphi 0, %s107
      %s111 = sphi 0, %s110
      %s127 = sphi 0, %s111
    $region4: #{tpu_custom_call.1} parent=1 // loop_header_branch
      %19 = sbr.rel (%p17) target = $region8
    $region5: #{tpu_custom_call.1} parent=1 // loop_body
      %s21 = ssub.s32 %s16, 1
      %s22 = ssub.s32 %s16, 2
      %s32 = sadd.s32 1, %s25
      %p33 = scmp.ge.s32.totalorder %s32, 1
      %s34 = scalar_select %p33, 0, %s32
      %s35 = sadd.s32 1, %s24
      %s36 = scalar_select %p33, %s35, %s24
      %p37 = scmp.ge.s32.totalorder %s36, 1
      %s38 = scalar_select %p37, 0, %s36
      %s39 = sadd.s32 1, %s23
      %s40 = scalar_select %p37, %s39, %s23
      %p41 = scmp.ge.s32.totalorder %s40, 2
      %s42 = scalar_select %p41, 0, %s40
      %s43 = sadd.s32 %s24, %s25
      %s44 = sadd.s32 %s38, %s34
      %s45 = ssub.s32 %s23, %s42
      %s46 = ssub.s32 %s43, %s44
      %s47 = sor.u32 %s45, %s46
      %p48 = scmp.eq.s32.totalorder %s47, 0
      %s50 = sadd.s32 %s49, 1
      %s51 = scalar_select %p48, %s49, %s50
      %p54 = pneg %p48
      %p55 = scmp.eq.s32.totalorder %s16, 1
      %p56 = por %p54, %p55
      %p57 = scmp.ne.s32.totalorder %s49, %s52
      %p58 = scmp.eq.s32.totalorder %s16, 0
      %p59 = por %p57, %p58
      %p60 = scmp.ne.s32.totalorder %s49, %s52
      %p61 = scmp.eq.s32.totalorder %s21, 1
      %p62 = por %p60, %p61
      %p63 = scmp.ne.s32.totalorder %s52, %s53
      %p64 = scmp.eq.s32.totalorder %s21, 0
      %p65 = por %p63, %p64
      %p66 = scmp.ne.s32.totalorder %s52, %s53
      %p67 = scmp.eq.s32.totalorder %s22, 1
      %p68 = por %p66, %p67
      %p70 = scmp.ne.s32.totalorder %s53, %s69
      %p71 = scmp.eq.s32.totalorder %s22, 0
      %p72 = por %p70, %p71
      %s73 = sadd.s32 %s24, %s25
      %s74 = sadd.s32 %s38, %s34
      %s75 = ssub.s32 %s23, %s42
      %s76 = ssub.s32 %s73, %s74
      %s77 = sor.u32 %s75, %s76
      %p78 = scmp.eq.s32.totalorder %s77, 0
      %s80 = sadd.s32 %s79, 1
      %s81 = scalar_select %p78, %s79, %s80
      %p84 = pneg %p78
      %p85 = scmp.eq.s32.totalorder %s16, 1
      %p86 = por %p84, %p85
      %p87 = scmp.ne.s32.totalorder %s79, %s82
      %p88 = scmp.eq.s32.totalorder %s16, 0
      %p89 = por %p87, %p88
      %p90 = scmp.ne.s32.totalorder %s79, %s82
      %p91 = scmp.eq.s32.totalorder %s21, 1
      %p92 = por %p90, %p91
      %p93 = scmp.ne.s32.totalorder %s82, %s83
      %p94 = scmp.eq.s32.totalorder %s21, 0
      %p95 = por %p93, %p94
      %p96 = scmp.ne.s32.totalorder %s82, %s83
      %p97 = scmp.eq.s32.totalorder %s22, 1
      %p98 = por %p96, %p97
      %p100 = scmp.ne.s32.totalorder %s83, %s99
      %p101 = scmp.eq.s32.totalorder %s22, 0
      %p102 = por %p100, %p101
      %s103 = ssub.s32 %s23, %s42
      %s104 = ssub.s32 %s24, %s38
      %s105 = sor.u32 %s103, %s104
      %p106 = scmp.eq.s32.totalorder %s105, 0
      %s108 = sadd.s32 %s107, 1
      %s109 = scalar_select %p106, %s107, %s108
      %p112 = pneg %p106
      %p113 = scmp.eq.s32.totalorder %s16, 1
      %p114 = por %p112, %p113
      %p115 = scmp.ne.s32.totalorder %s107, %s110
      %p116 = scmp.eq.s32.totalorder %s16, 0
      %p117 = por %p115, %p116
      %p118 = scmp.ne.s32.totalorder %s107, %s110
      %p119 = scmp.eq.s32.totalorder %s21, 1
      %p120 = por %p118, %p119
      %p121 = scmp.ne.s32.totalorder %s110, %s111
      %p122 = scmp.eq.s32.totalorder %s21, 0
      %p123 = por %p121, %p122
      %p124 = scmp.ne.s32.totalorder %s110, %s111
      %p125 = scmp.eq.s32.totalorder %s22, 1
      %p126 = por %p124, %p125
      %p128 = scmp.ne.s32.totalorder %s111, %s127
      %p129 = scmp.eq.s32.totalorder %s22, 0
      %p130 = por %p128, %p129
      %p131 = scmp.le.s32.totalorder 1, %s16
      %p132 = scmp.lt.s32.totalorder %s16, 3
      %p133 = pnand %p131, %p132
      %p134 = pneg %p133
      // Predicated region
      $region9: #{tpu_custom_call.1} parent=5 // pred_check
        _
      $region10: #{tpu_custom_call.1} parent=5 // pred_check_branch
        %136 = sbr.rel (%p133) target = $region12
      $region11: #{tpu_custom_call.1} parent=5 // pred_region
        %s137 = ssub.s32 %s16, 1
      $region12: #{tpu_custom_call.1} parent=5 // pred_fallthru
        _
      %p138 = scmp.lt.s32.totalorder %s16, 2
      // Predicated region
      $region13: #{tpu_custom_call.1} parent=5 // pred_check
        %p139 = pneg %p138
      $region14: #{tpu_custom_call.1} parent=5 // pred_check_branch
        %141 = sbr.rel (%p139) target = $region16
      $region15: #{tpu_custom_call.1} parent=5 // pred_region
        // Predicated region
        $region17: #{tpu_custom_call.1} parent=15 // pred_check
          %p142 = pneg %p59
        $region18: #{tpu_custom_call.1} parent=15 // pred_check_branch
          %144 = sbr.rel (%p142) target = $region20
        $region19: #{tpu_custom_call.1} parent=15 // pred_region
          %s145 = sand.u32 %s49, 1
          %s146 = scalar_lea.sflag [#allocation5], %s145
          %s147 = sand.u32 %s49, 1
          %s148 = smul.addr %s147, 8
          %s149 = scalar_lea.vmem [#allocation4], %s148
          %s150 = sadd.s32 %s24, %s25
          %s151 = smul.u32 2, %s150
          %153 = vsyncadd %s146, 0
          %s154 = smul.addr %s23, 2
          %s155 = sadd.s32 %s151, %s154
          %s156 = smul.addr %s155, 4
          %s157 = scalar_lea.hbm %s1, %s156
          %s159 = sshll.u32 %s157, 4
          %s160 = int_to_ptr.hbm [resolvable:$true] %s159
          %s161 = sshll.u32 %s149, 4
          %s162 = int_to_ptr.vmem [resolvable:$true] %s161
          %164 = dma.hbm_to_vmem [thread:$0]  %s160, 128, %s162, %s146
        $region20: #{tpu_custom_call.1} parent=15 // pred_fallthru
          _
        // Predicated region
        $region21: #{tpu_custom_call.1} parent=15 // pred_check
          %p165 = pneg %p89
        $region22: #{tpu_custom_call.1} parent=15 // pred_check_branch
          %167 = sbr.rel (%p165) target = $region24
        $region23: #{tpu_custom_call.1} parent=15 // pred_region
          %s168 = sand.u32 %s79, 1
          %s169 = scalar_lea.sflag [#allocation7], %s168
          %s170 = sand.u32 %s79, 1
          %s171 = smul.addr %s170, 2
          %s172 = scalar_lea.vmem [#allocation6], %s171
          %s173 = sadd.s32 %s24, %s25
          %s174 = smul.u32 2, %s173
          %176 = vsyncadd %s169, 0
          %s177 = smul.addr %s23, 2
          %s178 = sadd.s32 %s174, %s177
          %s179 = scalar_lea.hbm %s2, %s178
          %s181 = sshll.u32 %s179, 4
          %s182 = int_to_ptr.hbm [resolvable:$true] %s181
          %s183 = sshll.u32 %s172, 4
          %s184 = int_to_ptr.vmem [resolvable:$true] %s183
          %186 = dma.hbm_to_vmem [thread:$0]  %s182, 32, %s184, %s169
        $region24: #{tpu_custom_call.1} parent=15 // pred_fallthru
          _
      $region16: #{tpu_custom_call.1} parent=5 // pred_fallthru
        _
      %p187 = scmp.le.s32.totalorder 1, %s16
      %p188 = scmp.lt.s32.totalorder %s16, 3
      %p189 = pnand %p187, %p188
      %p190 = pneg %p189
      // Predicated region
      $region25: #{tpu_custom_call.1} parent=5 // pred_check
        _
      $region26: #{tpu_custom_call.1} parent=5 // pred_check_branch
        %192 = sbr.rel (%p189) target = $region28
      $region27: #{tpu_custom_call.1} parent=5 // pred_region
        %s193 = ssub.s32 %s16, 1
        %s194 = sand.u32 %s52, 1
        %s195 = scalar_lea.sflag [#allocation5], %s194
        %s196 = sand.u32 %s52, 1
        %s197 = smul.addr %s196, 8
        %s198 = scalar_lea.vmem [#allocation4], %s197
        // Predicated region
        $region29: #{tpu_custom_call.1} parent=27 // pred_check
          %p199 = pneg %p65
        $region30: #{tpu_custom_call.1} parent=27 // pred_check_branch
          %201 = sbr.rel (%p199) target = $region32
        $region31: #{tpu_custom_call.1} parent=27 // pred_region
          %203 = dma.done %s195, 128
        $region32: #{tpu_custom_call.1} parent=27 // pred_fallthru
          _
        %s204 = sand.u32 %s82, 1
        %s205 = scalar_lea.sflag [#allocation7], %s204
        %s206 = sand.u32 %s82, 1
        %s207 = smul.addr %s206, 2
        %s208 = scalar_lea.vmem [#allocation6], %s207
        // Predicated region
        $region33: #{tpu_custom_call.1} parent=27 // pred_check
          %p209 = pneg %p95
        $region34: #{tpu_custom_call.1} parent=27 // pred_check_branch
          %211 = sbr.rel (%p209) target = $region36
        $region35: #{tpu_custom_call.1} parent=27 // pred_region
          %213 = dma.done %s205, 32
        $region36: #{tpu_custom_call.1} parent=27 // pred_fallthru
          _
        %s214 = sand.u32 %s52, 1
        %s215 = scalar_lea.sflag [#allocation5], %s214
        %s216 = sand.u32 %s52, 1
        %s217 = smul.addr %s216, 8
        %s218 = scalar_lea.vmem [#allocation4], %s217
        %p219 = pneg %p65
        %p220 = pneg %p62
        %s221 = sand.u32 %s82, 1
        %s222 = scalar_lea.sflag [#allocation7], %s221
        %s223 = sand.u32 %s82, 1
        %s224 = smul.addr %s223, 2
        %s225 = scalar_lea.vmem [#allocation6], %s224
        %p226 = pneg %p95
        %p227 = pneg %p92
        %p228 = pneg %p123
        %p229 = pneg %p120
        %p230 = scmp.lt.s32.totalorder %s26, 1
        %s231 = scalar_select %p230, %s26, 1
        %p232 = scmp.lt.s32.totalorder %s27, 0
        %s233 = scalar_select %p232, %s27, 0
        %s234 = smul.addr %s233, 2
        %s235 = smul.addr %s231, 2
        %s236 = sadd.s32 %s234, %s235
        %s237 = smul.addr %s236, 4
        %s238 = scalar_lea.vmem %s3, %s237
        %s239 = sadd.s32 %s27, %s28
        %s240 = smul.u32 2, %s239
        %s241 = sadd.s32 %s27, %s28
        %s242 = smul.u32 2, %s241
        %p243 = scmp.lt.s32.totalorder %s26, 1
        %s244 = scalar_select %p243, %s26, 1
        %p245 = scmp.lt.s32.totalorder %s27, 0
        %s246 = scalar_select %p245, %s27, 0
        %s247 = smul.addr %s246, 2
        %s248 = smul.addr %s244, 2
        %s249 = sadd.s32 %s247, %s248
        %s250 = smul.addr %s249, 4
        %s251 = scalar_lea.vmem %s3, %s250
        %p252 = scmp.eq.s32.totalorder %s28, 0
        // Predicated region
        $region37: #{tpu_custom_call.1} parent=27 // pred_check
          %p253 = pneg %p252
        $region38: #{tpu_custom_call.1} parent=27 // pred_check_branch
          %255 = sbr.rel (%p253) target = $region40
        $region39: #{tpu_custom_call.1} parent=27 // pred_region
          %256 = vst [vmem:[%s251] sm:$0x77] 0.0
        $region40: #{tpu_custom_call.1} parent=27 // pred_fallthru
          _
        %v257 = vld [vmem:[%s198] sm:$0xff]
        %v258 = vld [vmem:[%s208] sm:$0x3]
        %vm259 = vcmp.ne.s32.totalorder %v258, 255
        %s260 = sld [smem:[#allocation3]]
        %v261 = vstv %s260
        %v262 = vsel %vm259, %v258, %v261
        %264 = vst [vmem:[#allocation1] ss:$2 sm:$0xff] %v257
        %v265 = vld.sshfl [vmem:[#allocation1] sm:$0xff pattern:$0x75316420]
        %v266 = vld.sshfl [vmem:[#allocation1 + $0x8] sm:$0xff pattern:$0x75316420]
        %vm269 = vcmask 1043456
        %v270 = vsel %vm269, %v265, -inf
        %v271 = vrot.slane %v270, 4
        %v272 = vmax.f32 %v270, %v271
        %v273 = vrot.slane %v272, 2
        %v274 = vmax.f32 %v272, %v273
        %v275 = vrot.slane %v274, 1
        %v276 = vmax.f32 %v274, %v275
        %v277 = vsel %vm269, %v266, -inf
        %v278 = vrot.slane %v277, 4
        %v279 = vmax.f32 %v277, %v278
        %v280 = vrot.slane %v279, 2
        %v281 = vmax.f32 %v279, %v280
        %v282 = vrot.slane %v281, 1
        %v283 = vmax.f32 %v281, %v282
        %v286 = vrot.slane %v283, 4
        %v287 = vsel %vm269, %v276, %v286
        %v289 = vsub.f32 %v257, %v287
        %v290 = vmul.f32 %v289, 1.442695
        %v291 = vpow.pop %v290
        %293 = vst [vmem:[#allocation1] ss:$2 sm:$0xff] %v291
        %v294 = vld.sshfl [vmem:[#allocation1] sm:$0xff pattern:$0x75316420]
        %v295 = vld.sshfl [vmem:[#allocation1 + $0x8] sm:$0xff pattern:$0x75316420]
        %v298 = vsel %vm269, %v294, 0.0
        %v299 = vrot.slane %v298, 4
        %v300 = vadd.f32 %v298, %v299
        %v301 = vrot.slane %v300, 2
        %v302 = vadd.f32 %v300, %v301
        %v303 = vrot.slane %v302, 1
        %v304 = vadd.f32 %v302, %v303
        %v305 = vsel %vm269, %v295, 0.0
        %v306 = vrot.slane %v305, 4
        %v307 = vadd.f32 %v305, %v306
        %v308 = vrot.slane %v307, 2
        %v309 = vadd.f32 %v307, %v308
        %v310 = vrot.slane %v309, 1
        %v311 = vadd.f32 %v309, %v310
        %v312 = vlaneseq
        %v313 = vshrl.u32 %v312, 7
        %v314 = vperm.slane %v262, 0
        %v315 = vperm.slane %v262, 1
        %vm316 = vcmp.eq.s32.totalorder %v313, %v314
        %vm317 = vcmp.eq.s32.totalorder %v313, %v315
        %318 = vst [vmem:[#allocation1] ss:$2 sm:$0xff] %v257
        %v319 = vld.sshfl [vmem:[#allocation1] sm:$0xff pattern:$0x75316420]
        %v320 = vld.sshfl [vmem:[#allocation1 + $0x8] sm:$0xff pattern:$0x75316420]
        %v323 = vsel %vm316, %v319, 0.0
        %v324 = vsel %vm317, %v320, 0.0
        %v325 = vsel %vm269, %v323, 0.0
        %v326 = vrot.slane %v325, 4
        %v327 = vadd.f32 %v325, %v326
        %v328 = vrot.slane %v327, 2
        %v329 = vadd.f32 %v327, %v328
        %v330 = vrot.slane %v329, 1
        %v331 = vadd.f32 %v329, %v330
        %v332 = vsel %vm269, %v324, 0.0
        %v333 = vrot.slane %v332, 4
        %v334 = vadd.f32 %v332, %v333
        %v335 = vrot.slane %v334, 2
        %v336 = vadd.f32 %v334, %v335
        %v337 = vrot.slane %v336, 1
        %v338 = vadd.f32 %v336, %v337
        %v339 = vlog2.pop %v304
        %v340 = vmul.f32 %v339, 0.6931472
        %v341 = vlog2.pop %v311
        %v342 = vmul.f32 %v341, 0.6931472
        %v343 = vadd.f32 %v276, %v340
        %v344 = vadd.f32 %v283, %v342
        %v345 = vsub.f32 %v343, %v331
        %v346 = vsub.f32 %v344, %v338
        %v349 = vrot.slane %v346, 7
        %vm350 = vcmask 1040384
        %v351 = vsel %vm350, %v345, %v349
        %v353 = vsel %vm259, %v351, 0.0
        %v354 = vsub.f32 %v331, %v343
        %v355 = vsub.f32 %v338, %v344
        %v356 = vmul.f32 %v354, 1.442695
        %v357 = vpow.pop %v356
        %v358 = vmul.f32 %v355, 1.442695
        %v359 = vpow.pop %v358
        %v360 = vld [vmem:[%s251] sm:$0x77]
        %v361 = vsel %vm259, 1, 0
        %v362 = vcvt.s32.f32 %v361
        %v364 = vperm.slane %v353, 0
        %v365 = vperm.slane %v353, 1
        %v369 = vperm.slane %v362, 0
        %v370 = vperm.slane %v362, 1
        %v373 = vsel %vm350, %v364, %v369
        %v374 = vsel %vm350, %v365, %v370
        %vm375 = vcmask 1041408
        %v376 = vsel %vm375, %v373, %v357
        %v377 = vsel %vm375, %v374, %v359
        %v380 = vrot.slane %v377, 4
        %v381 = vsel %vm269, %v376, %v380
        %v383 = vadd.f32 %v360, %v381
        %384 = vst [vmem:[%s251] sm:$0x77] %v383
        %p385 = scmp.lt.s32.totalorder %s26, 1
        %s386 = scalar_select %p385, %s26, 1
        %p387 = scmp.lt.s32.totalorder %s27, 0
        %s388 = scalar_select %p387, %s27, 0
        %s389 = smul.addr %s388, 2
        %s390 = smul.addr %s386, 2
        %s391 = sadd.s32 %s389, %s390
        %s392 = smul.addr %s391, 4
        %s393 = scalar_lea.vmem %s3, %s392
        // Predicated region
        $region41: #{tpu_custom_call.1} parent=27 // pred_check
          %p394 = pneg %p120
        $region42: #{tpu_custom_call.1} parent=27 // pred_check_branch
          %396 = sbr.rel (%p394) target = $region44
        $region43: #{tpu_custom_call.1} parent=27 // pred_region
          _
        $region44: #{tpu_custom_call.1} parent=27 // pred_fallthru
          _
      $region28: #{tpu_custom_call.1} parent=5 // pred_fallthru
        _
      %p397 = scmp.le.s32.totalorder 2, %s16
      // Predicated region
      $region45: #{tpu_custom_call.1} parent=5 // pred_check
        %p398 = pneg %p397
      $region46: #{tpu_custom_call.1} parent=5 // pred_check_branch
        %400 = sbr.rel (%p398) target = $region48
      $region47: #{tpu_custom_call.1} parent=5 // pred_region
        %s401 = ssub.s32 %s16, 2
        // Predicated region
        $region49: #{tpu_custom_call.1} parent=47 // pred_check
          %p402 = pneg %p126
        $region50: #{tpu_custom_call.1} parent=47 // pred_check_branch
          %404 = sbr.rel (%p402) target = $region52
        $region51: #{tpu_custom_call.1} parent=47 // pred_region
          %p405 = scmp.lt.s32.totalorder %s29, 1
          %s406 = scalar_select %p405, %s29, 1
          %p407 = scmp.lt.s32.totalorder %s30, 0
          %s408 = scalar_select %p407, %s30, 0
          %s409 = smul.addr %s408, 2
          %s410 = smul.addr %s406, 2
          %s411 = sadd.s32 %s409, %s410
          %s412 = smul.addr %s411, 4
          %s413 = scalar_lea.vmem %s3, %s412
        $region52: #{tpu_custom_call.1} parent=47 // pred_fallthru
          _
      $region48: #{tpu_custom_call.1} parent=5 // pred_fallthru
        _
    $region6: #{tpu_custom_call.1} parent=1 // loop_footer
      %s20 = sadd.s32 1, %s16
    $region7: #{tpu_custom_call.1} parent=1 // loop_footer_branch
      %15 = sbr.rel target = $region3
    $region8: #{tpu_custom_call.1} parent=1 // loop_exit
      _
    %414 = vsyncpa [#allocation5], 1
    %s415 = scalar_lea.sflag [#allocation5], 1
    %416 = vsyncpa %s415, 1
    %417 = vsyncpa [#allocation7], 1
    %s418 = scalar_lea.sflag [#allocation7], 1
    %419 = vsyncpa %s418, 1

</llo_original>
